<compile_context>
chip_gen: v6e
topology: v6e:2x2x1
jax: 0.10.0
libtpu: 0.0.40
codegen_flags: <defaults>
</compile_context>

<pallas_src>
import jax
import jax.numpy as jnp
from jax import lax
from jax.experimental import pallas as pl
from jax.experimental.pallas import tpu as pltpu

D_IN = 64
D_HID = 64
D_OUT = 2
D_OUT_PAD = 128   # lane-dense padded width for the fc4 logits


def _round_up(x, m):
    return (x + m - 1) // m * m


def head2_kernel(x_ref, w3_ref, b3_ref, w4_ref, b4_ref, o_ref):
    # x_ref: (TN, 64)  w3: (64, 64)  b3: (1, 64)
    # w4: (64, 128) (columns >= 2 are zero)  b4: (1, 128)  o_ref: (TN, 2)
    x = x_ref[...]

    # fc3 + ReLU
    h = jnp.dot(x, w3_ref[...], preferred_element_type=jnp.float32) + b3_ref[...]
    h = jnp.maximum(h, 0.0)
    # TODO(synk): F.dropout(p=0.5) in the reference defaults to training=True;
    # implemented here as identity (inference) — stochastic masking not implemented.

    # fc4 (lane-dense, 128-wide padded) + ReLU
    z = jnp.dot(h, w4_ref[...], preferred_element_type=jnp.float32) + b4_ref[...]
    z = jnp.maximum(z, 0.0)
    # TODO(synk): second F.dropout also treated as identity (inference).

    # softmax over the 2 real classes; padded lanes -> -inf so exp() == 0.
    col = lax.broadcasted_iota(jnp.int32, z.shape, 1)
    z = jnp.where(col < D_OUT, z, -jnp.inf)
    m = jnp.max(z, axis=1, keepdims=True)
    e = jnp.exp(z - m)
    s = jnp.sum(e, axis=1, keepdims=True)
    p = e / s

    o_ref[...] = p[:, :D_OUT]


def head2_forward(x, params, *, tile_n=128):
    N, D = x.shape
    assert D == D_IN

    tn = min(tile_n, _round_up(N, 8))
    n_pad = _round_up(N, tn)
    if n_pad != N:
        x = jnp.pad(x, ((0, n_pad - N), (0, 0)))

    out = pl.pallas_call(
        head2_kernel,
        out_shape=jax.ShapeDtypeStruct((n_pad, D_OUT), jnp.float32),
        grid=(n_pad // tn,),
        in_specs=[
            pl.BlockSpec((tn, D_IN), lambda i: (i, 0)),           # x tile
            pl.BlockSpec((D_IN, D_HID), lambda i: (0, 0)),        # fc3 weight (resident)
            pl.BlockSpec((1, D_HID), lambda i: (0, 0)),           # fc3 bias
            pl.BlockSpec((D_HID, D_OUT_PAD), lambda i: (0, 0)),   # fc4 weight, padded (resident)
            pl.BlockSpec((1, D_OUT_PAD), lambda i: (0, 0)),       # fc4 bias, padded
        ],
        out_specs=pl.BlockSpec((tn, D_OUT), lambda i: (i, 0)),
        compiler_params=pltpu.CompilerParams(
            dimension_semantics=("parallel",)),
    )(x, params["fc3_wT"], params["fc3_b"],
      params["fc4_wT_pad"], params["fc4_b_pad"])

    return out[:N] if n_pad != N else out


def init_params(key):
    # PyTorch nn.Linear default init: U(-1/sqrt(fan_in), 1/sqrt(fan_in)).
    k0, k1, k2, k3 = jax.random.split(key, 4)
    b3 = 1.0 / (D_IN ** 0.5)
    b4 = 1.0 / (D_HID ** 0.5)
    w3 = jax.random.uniform(k0, (D_HID, D_IN), jnp.float32, -b3, b3)    # (out, in)
    bias3 = jax.random.uniform(k1, (D_HID,), jnp.float32, -b3, b3)
    w4 = jax.random.uniform(k2, (D_OUT, D_HID), jnp.float32, -b4, b4)   # (out, in)
    bias4 = jax.random.uniform(k3, (D_OUT,), jnp.float32, -b4, b4)

    # Transpose for x @ W.T layout; pad fc4 to a lane-dense 128-wide block.
    w4t_pad = jnp.zeros((D_HID, D_OUT_PAD), jnp.float32).at[:, :D_OUT].set(w4.T)
    b4_pad = jnp.zeros((1, D_OUT_PAD), jnp.float32).at[0, :D_OUT].set(bias4)
    return dict(
        fc3_wT=w3.T,                       # (64, 64)
        fc3_b=bias3.reshape(1, D_HID),     # (1, 64)
        fc4_wT_pad=w4t_pad,                # (64, 128)
        fc4_b_pad=b4_pad,                  # (1, 128)
        _fc4_wT=w4.T, _fc4_b=bias4.reshape(1, D_OUT),   # unpadded copies for the reference check
    )


def _reference(x, params):
    h = jnp.maximum(x @ params["fc3_wT"] + params["fc3_b"], 0.0)
    z = jnp.maximum(h @ params["_fc4_wT"] + params["_fc4_b"], 0.0)
    return jax.nn.softmax(z, axis=1)


if __name__ == "__main__":
    key = jax.random.PRNGKey(0)
    kx, kp = jax.random.split(key)
    N = 5                                                   # exercises the batch-padding path
    x = jax.random.normal(kx, (N, D_IN), jnp.float32)
    params = init_params(kp)

    out = jax.jit(head2_forward)(x, params)
    out = jax.block_until_ready(out)

    assert out.shape == (N, D_OUT) and out.dtype == jnp.float32
    assert bool(jnp.all(jnp.isfinite(out)))
    # rows are probabilities
    assert bool(jnp.allclose(jnp.sum(out, axis=1), 1.0, atol=1e-5))
    # matches the pure-JAX reference of the PyTorch forward (eval semantics)
    ref = _reference(x, params)
    assert bool(jnp.allclose(out, ref, atol=1e-5, rtol=1e-5))
    print("KERNEL_OK")
</pallas_src>

<mosaic_0001>
module attributes {stable_mosaic.version = 11 : i64} {
  func.func @head2_kernel(%arg0: i32, %arg1: memref<8x64xf32, #tpu.memory_space<vmem>>, %arg2: memref<64x64xf32, #tpu.memory_space<vmem>>, %arg3: memref<1x64xf32, #tpu.memory_space<vmem>>, %arg4: memref<64x128xf32, #tpu.memory_space<vmem>>, %arg5: memref<1x128xf32, #tpu.memory_space<vmem>>, %arg6: memref<8x2xf32, #tpu.memory_space<vmem>>) attributes {dimension_semantics = [#tpu.dimension_semantics<parallel>], iteration_bounds = array<i64: 1>, scalar_prefetch = 0 : i64, scratch_operands = 0 : i64, tpu.core_type = #tpu.core_type<tc>, window_params = [{transform_indices = @transform_0, window_bounds = array<i64: 8, 64>}, {pipeline_mode = #tpu.pipeline_mode<synchronous>, transform_indices = @transform_1, window_bounds = array<i64: 64, 64>}, {pipeline_mode = #tpu.pipeline_mode<synchronous>, transform_indices = @transform_2, window_bounds = array<i64: 1, 64>}, {pipeline_mode = #tpu.pipeline_mode<synchronous>, transform_indices = @transform_3, window_bounds = array<i64: 64, 128>}, {pipeline_mode = #tpu.pipeline_mode<synchronous>, transform_indices = @transform_4, window_bounds = array<i64: 1, 128>}, {transform_indices = @transform_5, window_bounds = array<i64: 8, 2>}]} {
    %c0 = arith.constant 0 : index
    %c0_0 = arith.constant 0 : index
    %0 = vector.load %arg1[%c0, %c0_0] : memref<8x64xf32, #tpu.memory_space<vmem>>, vector<8x64xf32>
    %c0_1 = arith.constant 0 : index
    %c0_2 = arith.constant 0 : index
    %1 = vector.load %arg2[%c0_1, %c0_2] : memref<64x64xf32, #tpu.memory_space<vmem>>, vector<64x64xf32>
    %cst = arith.constant dense<0.000000e+00> : vector<8x64xf32>
    %2 = tpu.matmul %0, %1, %cst {dimension_numbers = #tpu.dot_dimension_numbers<[1], [0], [0], [1], [0, 0, 1, 1], [], []>} : vector<8x64xf32>, vector<64x64xf32>, vector<8x64xf32> -> vector<8x64xf32>
    %c0_3 = arith.constant 0 : index
    %c0_4 = arith.constant 0 : index
    %3 = vector.load %arg3[%c0_3, %c0_4] : memref<1x64xf32, #tpu.memory_space<vmem>>, vector<1x64xf32>
    %4 = vector.broadcast %3 : vector<1x64xf32> to vector<8x64xf32>
    %5 = arith.addf %2, %4 : vector<8x64xf32>
    %cst_5 = arith.constant 0.000000e+00 : f32
    %6 = vector.broadcast %cst_5 : f32 to vector<8x64xf32>
    %7 = arith.maximumf %5, %6 : vector<8x64xf32>
    %c0_6 = arith.constant 0 : index
    %c0_7 = arith.constant 0 : index
    %8 = vector.load %arg4[%c0_6, %c0_7] : memref<64x128xf32, #tpu.memory_space<vmem>>, vector<64x128xf32>
    %cst_8 = arith.constant dense<0.000000e+00> : vector<8x128xf32>
    %9 = tpu.matmul %7, %8, %cst_8 {dimension_numbers = #tpu.dot_dimension_numbers<[1], [0], [0], [1], [0, 0, 1, 1], [], []>} : vector<8x64xf32>, vector<64x128xf32>, vector<8x128xf32> -> vector<8x128xf32>
    %c0_9 = arith.constant 0 : index
    %c0_10 = arith.constant 0 : index
    %10 = vector.load %arg5[%c0_9, %c0_10] : memref<1x128xf32, #tpu.memory_space<vmem>>, vector<1x128xf32>
    %11 = vector.broadcast %10 : vector<1x128xf32> to vector<8x128xf32>
    %12 = arith.addf %9, %11 : vector<8x128xf32>
    %cst_11 = arith.constant 0.000000e+00 : f32
    %13 = vector.broadcast %cst_11 : f32 to vector<8x128xf32>
    %14 = arith.maximumf %12, %13 : vector<8x128xf32>
    %15 = tpu.iota {dimensions = array<i32: 1>} : vector<8x128xi32>
    %c2_i32 = arith.constant 2 : i32
    %16 = vector.broadcast %c2_i32 : i32 to vector<8x128xi32>
    %17 = arith.cmpi slt, %15, %16 : vector<8x128xi32>
    %cst_12 = arith.constant 0xFF800000 : f32
    %18 = vector.broadcast %cst_12 : f32 to vector<8x128xf32>
    %19 = arith.select %17, %14, %18 : vector<8x128xi1>, vector<8x128xf32>
    %cst_13 = arith.constant dense<0xFF800000> : vector<8xf32>
    %20 = vector.multi_reduction <maximumf>, %19, %cst_13 [1] : vector<8x128xf32> to vector<8xf32>
    %21 = vector.shape_cast %20 : vector<8xf32> to vector<8x1xf32>
    %22 = vector.broadcast %21 : vector<8x1xf32> to vector<8x128xf32>
    %23 = arith.subf %19, %22 : vector<8x128xf32>
    %24 = math.exp %23 : vector<8x128xf32>
    %cst_14 = arith.constant dense<0.000000e+00> : vector<8xf32>
    %25 = vector.multi_reduction <add>, %24, %cst_14 [1] : vector<8x128xf32> to vector<8xf32>
    %26 = vector.shape_cast %25 : vector<8xf32> to vector<8x1xf32>
    %27 = vector.broadcast %26 : vector<8x1xf32> to vector<8x128xf32>
    %28 = arith.divf %24, %27 : vector<8x128xf32>
    %29 = vector.extract_strided_slice %28 {offsets = [0, 0], sizes = [8, 2], strides = [1, 1]} : vector<8x128xf32> to vector<8x2xf32>
    %c0_15 = arith.constant 0 : index
    %c0_16 = arith.constant 0 : index
    %30 = vector.load %arg6[%c0_15, %c0_16] : memref<8x2xf32, #tpu.memory_space<vmem>>, vector<8x2xf32>
    tpu.vector_store %arg6[%c0_15, %c0_16], %29 {strides = array<i32>} : memref<8x2xf32, #tpu.memory_space<vmem>>, vector<8x2xf32>,
    return
  }
  func.func @transform_0(%arg0: i32) -> (i32, i32) {
    %c0_i32 = arith.constant 0 : i32
    %c0_i32_0 = arith.constant 0 : i32
    return %arg0, %c0_i32 : i32, i32
  }
  func.func @transform_1(%arg0: i32) -> (i32, i32) {
    %c0_i32 = arith.constant 0 : i32
    %c0_i32_0 = arith.constant 0 : i32
    %c0_i32_1 = arith.constant 0 : i32
    return %c0_i32, %c0_i32_0 : i32, i32
  }
  func.func @transform_2(%arg0: i32) -> (i32, i32) {
    %c0_i32 = arith.constant 0 : i32
    %c0_i32_0 = arith.constant 0 : i32
    %c0_i32_1 = arith.constant 0 : i32
    return %c0_i32, %c0_i32_0 : i32, i32
  }
  func.func @transform_3(%arg0: i32) -> (i32, i32) {
    %c0_i32 = arith.constant 0 : i32
    %c0_i32_0 = arith.constant 0 : i32
    %c0_i32_1 = arith.constant 0 : i32
    return %c0_i32, %c0_i32_0 : i32, i32
  }
  func.func @transform_4(%arg0: i32) -> (i32, i32) {
    %c0_i32 = arith.constant 0 : i32
    %c0_i32_0 = arith.constant 0 : i32
    %c0_i32_1 = arith.constant 0 : i32
    return %c0_i32, %c0_i32_0 : i32, i32
  }
  func.func @transform_5(%arg0: i32) -> (i32, i32) {
    %c0_i32 = arith.constant 0 : i32
    %c0_i32_0 = arith.constant 0 : i32
    return %arg0, %c0_i32 : i32, i32
  }
}

</mosaic_0001>

<llo_original>
// kernel: head2_forward.1
$region0: #{head2_forward.1}
  #allocation0 [shape = 'u32[]', space=smem, size = 0x4, offset = 0x4, fixed_abs, tag = 'smem constant byte address 0x4 - core index']
  #allocation1 [shape = 'u32[144,128]{1,0:T(1,128)}', space=vmem, size = 0x12000, scoped, tag = 'internal scratch']
  %s0 = inlined_call_operand.vmem [shape: f32[8,64], index: 0, kind: input, shape index: {}]
  %s1 = inlined_call_operand.hbm [shape: f32[64,64], index: 1, kind: input, shape index: {}]
  %s2 = inlined_call_operand.vmem [shape: f32[1,64], index: 2, kind: input, shape index: {}]
  %s3 = inlined_call_operand.hbm [shape: f32[64,128], index: 3, kind: input, shape index: {}]
  %s4 = inlined_call_operand.vmem [shape: f32[1,128], index: 4, kind: input, shape index: {}]
  %s5 = inlined_call_operand.vmem [shape: f32[8,2], index: 5, kind: output, shape index: {}]
  %s6 = sld [smem:[#allocation0]]
  $region38: #{head2_forward.1} parent=0
    _
  %s8 = ssub.s32 1, %s6
  %s9 = scalar_select 0, %s8, %s6
  $region1: #{head2_forward.1} parent=0
    #allocation2 [shape = 'u8[32768]{0}', space=vmem, size = 0x8000, scoped, tag = 'input window, operand 1, single buffered']
    #allocation3 [shape = 's32[1]{0}', space=sflag, size = 0x4, scoped, tag = 'scoped memory for head2_forward.1']
    #allocation4 [shape = 'u8[32768]{0}', space=vmem, size = 0x8000, scoped, tag = 'input window, operand 3, single buffered']
    #allocation5 [shape = 's32[1]{0}', space=sflag, size = 0x4, scoped, tag = 'scoped memory for head2_forward.1']
    %10 = vsyncpa [#allocation3], 0
    %11 = vsyncpa [#allocation5], 0
    // Predicated region
    $region2: #{head2_forward.1} parent=1 // pred_check
      _
    $region3: #{head2_forward.1} parent=1 // pred_check_branch
      %13 = sbr.rel (0) target = $region5
    $region4: #{head2_forward.1} parent=1 // pred_region
      _
    $region5: #{head2_forward.1} parent=1 // pred_fallthru
      _
    // Predicated region
    $region6: #{head2_forward.1} parent=1 // pred_check
      _
    $region7: #{head2_forward.1} parent=1 // pred_check_branch
      %15 = sbr.rel (0) target = $region9
    $region8: #{head2_forward.1} parent=1 // pred_region
      %s17 = ssub.s32 1024, 1024
      %18 = vsyncadd [#allocation3], %s17
      %s19 = sshll.u32 [#allocation2], 4
      %s20 = int_to_ptr.vmem [resolvable:$true] %s19
      %25 = dma.hbm_to_vmem [thread:$0]  %s1, 1024, %s20, [#allocation3], 128, 128, 8
    $region9: #{head2_forward.1} parent=1 // pred_fallthru
      _
    // Predicated region
    $region10: #{head2_forward.1} parent=1 // pred_check
      _
    $region11: #{head2_forward.1} parent=1 // pred_check_branch
      %27 = sbr.rel (0) target = $region13
    $region12: #{head2_forward.1} parent=1 // pred_region
      _
    $region13: #{head2_forward.1} parent=1 // pred_fallthru
      _
    // Predicated region
    $region14: #{head2_forward.1} parent=1 // pred_check
      _
    $region15: #{head2_forward.1} parent=1 // pred_check_branch
      %29 = sbr.rel (0) target = $region17
    $region16: #{head2_forward.1} parent=1 // pred_region
      %s31 = ssub.s32 1024, 1024
      %32 = vsyncadd [#allocation5], %s31
      %s33 = sshll.u32 [#allocation4], 4
      %s34 = int_to_ptr.vmem [resolvable:$true] %s33
      %39 = dma.hbm_to_vmem [thread:$0]  %s3, 1024, %s34, [#allocation5], 128, 128, 8
    $region17: #{head2_forward.1} parent=1 // pred_fallthru
      _
    // Predicated region
    $region18: #{head2_forward.1} parent=1 // pred_check
      _
    $region19: #{head2_forward.1} parent=1 // pred_check_branch
      %41 = sbr.rel (0) target = $region21
    $region20: #{head2_forward.1} parent=1 // pred_region
      _
    $region21: #{head2_forward.1} parent=1 // pred_fallthru
      _
    // Predicated region
    $region22: #{head2_forward.1} parent=1 // pred_check
      _
    $region23: #{head2_forward.1} parent=1 // pred_check_branch
      %43 = sbr.rel (0) target = $region25
    $region24: #{head2_forward.1} parent=1 // pred_region
      %44 = dma.done [#allocation3], 1024
    $region25: #{head2_forward.1} parent=1 // pred_fallthru
      _
    // Predicated region
    $region26: #{head2_forward.1} parent=1 // pred_check
      _
    $region27: #{head2_forward.1} parent=1 // pred_check_branch
      %46 = sbr.rel (0) target = $region29
    $region28: #{head2_forward.1} parent=1 // pred_region
      %47 = dma.done [#allocation5], 1024
    $region29: #{head2_forward.1} parent=1 // pred_fallthru
      _
    %v48 = vld [vmem:[%s0] sm:$0xff]
    %v49 = vld [vmem:[#allocation2] sm:$0xff]
    %v50 = vld [vmem:[#allocation2 + $0x8] sm:$0xff]
    %v51 = vld [vmem:[#allocation2 + $0x10] sm:$0xff]
    %v52 = vld [vmem:[#allocation2 + $0x18] sm:$0xff]
    %v53 = vld [vmem:[#allocation2 + $0x20] sm:$0xff]
    %v54 = vld [vmem:[#allocation2 + $0x28] sm:$0xff]
    %v55 = vld [vmem:[#allocation2 + $0x30] sm:$0xff]
    %v56 = vld [vmem:[#allocation2 + $0x38] sm:$0xff]
    %v57 = vld [vmem:[%s2] sm:$0x1]
    %v59 = vlaneseq
    %v60 = vshrl.u32 %v59, 7
    %v61 = vsub.s32 0, %v60
    %v62 = vrot.slane %v57, %v61
    %vm64 = vcmask 523264
    %v66 = vsel %vm64, %v48, 0
    %68 = vmatprep.subr.mxu0 0.0
    %69 = vmatpush1.msra.mxu0 0.0
    %70 = vmatprep.subr.mxu0 0.0
    %71 = vmatpush1.msra.mxu0 0.0
    %72 = vmatprep.subr.mxu0 0.0
    %73 = vmatpush1.msra.mxu0 0.0
    %74 = vmatprep.subr.mxu0 0.0
    %75 = vmatpush1.msra.mxu0 0.0
    %76 = vmatprep.subr.mxu0 0.0
    %77 = vmatpush1.msra.mxu0 0.0
    %78 = vmatprep.subr.mxu0 0.0
    %79 = vmatpush1.msra.mxu0 0.0
    %80 = vmatprep.subr.mxu0 0.0
    %81 = vmatpush1.msra.mxu0 0.0
    %82 = vmatprep.subr.mxu0 0.0
    %83 = vmatpush1.msra.mxu0 0.0
    %84 = vmatprep.subr.mxu0 0.0
    %85 = vmatpush1.msra.mxu0 %v56
    %86 = vmatprep.subr.mxu0 0.0
    %87 = vmatpush1.msra.mxu0 %v55
    %88 = vmatprep.subr.mxu0 0.0
    %89 = vmatpush1.msra.mxu0 %v54
    %90 = vmatprep.subr.mxu0 0.0
    %91 = vmatpush1.msra.mxu0 %v53
    %92 = vmatprep.subr.mxu0 0.0
    %93 = vmatpush1.msra.mxu0 %v52
    %94 = vmatprep.subr.mxu0 0.0
    %95 = vmatpush1.msra.mxu0 %v51
    %96 = vmatprep.subr.mxu0 0.0
    %97 = vmatpush1.msra.mxu0 %v50
    %98 = vmatprep.subr.mxu0 0.0
    %99 = vmatpush1.msra.mxu0 %v49
    %100 = vmatprep.subr.mxu0 0.0
    %101 = vmatpush2.msra.mxu0 0.0
    %102 = vmatprep.subr.mxu0 0.0
    %103 = vmatpush2.msra.mxu0 0.0
    %104 = vmatprep.subr.mxu0 0.0
    %105 = vmatpush2.msra.mxu0 0.0
    %106 = vmatprep.subr.mxu0 0.0
    %107 = vmatpush2.msra.mxu0 0.0
    %108 = vmatprep.subr.mxu0 0.0
    %109 = vmatpush2.msra.mxu0 0.0
    %110 = vmatprep.subr.mxu0 0.0
    %111 = vmatpush2.msra.mxu0 0.0
    %112 = vmatprep.subr.mxu0 0.0
    %113 = vmatpush2.msra.mxu0 0.0
    %114 = vmatprep.subr.mxu0 0.0
    %115 = vmatpush2.msra.mxu0 0.0
    %116 = vmatprep.subr.mxu0 0.0
    %117 = vmatpush2.msra.mxu0 0.0
    %118 = vmatprep.subr.mxu0 0.0
    %119 = vmatpush2.msra.mxu0 0.0
    %120 = vmatprep.subr.mxu0 0.0
    %121 = vmatpush2.msra.mxu0 0.0
    %122 = vmatprep.subr.mxu0 0.0
    %123 = vmatpush2.msra.mxu0 0.0
    %124 = vmatprep.subr.mxu0 0.0
    %125 = vmatpush2.msra.mxu0 0.0
    %126 = vmatprep.subr.mxu0 0.0
    %127 = vmatpush2.msra.mxu0 0.0
    %128 = vmatprep.subr.mxu0 0.0
    %129 = vmatpush2.msra.mxu0 0.0
    %130 = vmatprep.subr.mxu0 0.0
    %131 = vmatpush2.msra.mxu0 0.0
    %132 = vmatprep.mubr.f32.mxu0 0.0
    %133 = vmatmul.mubr.f32.gmra.mxu0 %v66
    %v134 = vpop.f32.mrf.mxu0
    %v135 = vadd.f32 %v62, %v134
    %v136 = vpop.f32.mrf.mxu0
    %137 = vdwg.mxu0
    %v138 = vmax.f32 %v135, 0.0
    %v139 = vld [vmem:[#allocation4] sm:$0xff]
    %v140 = vld [vmem:[#allocation4 + $0x8] sm:$0xff]
    %v141 = vld [vmem:[#allocation4 + $0x10] sm:$0xff]
    %v142 = vld [vmem:[#allocation4 + $0x18] sm:$0xff]
    %v143 = vld [vmem:[#allocation4 + $0x20] sm:$0xff]
    %v144 = vld [vmem:[#allocation4 + $0x28] sm:$0xff]
    %v145 = vld [vmem:[#allocation4 + $0x30] sm:$0xff]
    %v146 = vld [vmem:[#allocation4 + $0x38] sm:$0xff]
    %v147 = vld [vmem:[%s4] sm:$0x1]
    %v149 = vlaneseq
    %v150 = vshrl.u32 %v149, 7
    %v151 = vsub.s32 0, %v150
    %v152 = vrot.slane %v147, %v151
    %v155 = vsel %vm64, %v138, 0
    %157 = vmatprep.subr.mxu0 0.0
    %158 = vmatpush1.msra.mxu0 0.0
    %159 = vmatprep.subr.mxu0 0.0
    %160 = vmatpush1.msra.mxu0 0.0
    %161 = vmatprep.subr.mxu0 0.0
    %162 = vmatpush1.msra.mxu0 0.0
    %163 = vmatprep.subr.mxu0 0.0
    %164 = vmatpush1.msra.mxu0 0.0
    %165 = vmatprep.subr.mxu0 0.0
    %166 = vmatpush1.msra.mxu0 0.0
    %167 = vmatprep.subr.mxu0 0.0
    %168 = vmatpush1.msra.mxu0 0.0
    %169 = vmatprep.subr.mxu0 0.0
    %170 = vmatpush1.msra.mxu0 0.0
    %171 = vmatprep.subr.mxu0 0.0
    %172 = vmatpush1.msra.mxu0 0.0
    %173 = vmatprep.subr.mxu0 0.0
    %174 = vmatpush1.msra.mxu0 %v146
    %175 = vmatprep.subr.mxu0 0.0
    %176 = vmatpush1.msra.mxu0 %v145
    %177 = vmatprep.subr.mxu0 0.0
    %178 = vmatpush1.msra.mxu0 %v144
    %179 = vmatprep.subr.mxu0 0.0
    %180 = vmatpush1.msra.mxu0 %v143
    %181 = vmatprep.subr.mxu0 0.0
    %182 = vmatpush1.msra.mxu0 %v142
    %183 = vmatprep.subr.mxu0 0.0
    %184 = vmatpush1.msra.mxu0 %v141
    %185 = vmatprep.subr.mxu0 0.0
    %186 = vmatpush1.msra.mxu0 %v140
    %187 = vmatprep.subr.mxu0 0.0
    %188 = vmatpush1.msra.mxu0 %v139
    %189 = vmatprep.subr.mxu0 0.0
    %190 = vmatpush2.msra.mxu0 0.0
    %191 = vmatprep.subr.mxu0 0.0
    %192 = vmatpush2.msra.mxu0 0.0
    %193 = vmatprep.subr.mxu0 0.0
    %194 = vmatpush2.msra.mxu0 0.0
    %195 = vmatprep.subr.mxu0 0.0
    %196 = vmatpush2.msra.mxu0 0.0
    %197 = vmatprep.subr.mxu0 0.0
    %198 = vmatpush2.msra.mxu0 0.0
    %199 = vmatprep.subr.mxu0 0.0
    %200 = vmatpush2.msra.mxu0 0.0
    %201 = vmatprep.subr.mxu0 0.0
    %202 = vmatpush2.msra.mxu0 0.0
    %203 = vmatprep.subr.mxu0 0.0
    %204 = vmatpush2.msra.mxu0 0.0
    %205 = vmatprep.subr.mxu0 0.0
    %206 = vmatpush2.msra.mxu0 0.0
    %207 = vmatprep.subr.mxu0 0.0
    %208 = vmatpush2.msra.mxu0 0.0
    %209 = vmatprep.subr.mxu0 0.0
    %210 = vmatpush2.msra.mxu0 0.0
    %211 = vmatprep.subr.mxu0 0.0
    %212 = vmatpush2.msra.mxu0 0.0
    %213 = vmatprep.subr.mxu0 0.0
    %214 = vmatpush2.msra.mxu0 0.0
    %215 = vmatprep.subr.mxu0 0.0
    %216 = vmatpush2.msra.mxu0 0.0
    %217 = vmatprep.subr.mxu0 0.0
    %218 = vmatpush2.msra.mxu0 0.0
    %219 = vmatprep.subr.mxu0 0.0
    %220 = vmatpush2.msra.mxu0 0.0
    %221 = vmatprep.mubr.f32.mxu0 0.0
    %222 = vmatmul.mubr.f32.gmra.mxu0 %v155
    %v223 = vpop.f32.mrf.mxu0
    %v224 = vadd.f32 %v152, %v223
    %v225 = vpop.f32.mrf.mxu0
    %226 = vdwg.mxu0
    %v227 = vmax.f32 %v224, 0.0
    %v228 = vlaneseq
    %v229 = vand.u32 %v228, 127
    %vm230 = vcmp.lt.s32.totalorder %v229, 2
    %v231 = vsel %vm230, %v227, -inf
    %232 = vmax.xlane.f32.xlu0 %v231
    %v233 = vpop.xlane.xlu0 %232
    %v234 = vsub.f32 %v231, %v233
    %v235 = vmul.f32 %v234, 1.442695
    %v236 = vpow.pop %v235
    %237 = vadd.xlane.f32.xlu0 %v236
    %v238 = vpop.xlane.xlu0 %237
    %v239 = vrcp.pop %v238
    %v240 = vmul.f32 %v236, %v239
    %vm241 = vcmask 15360
    %242 = vst.msk [vmem:[%s5] sm:$0xff] %vm241, %v240
    // Predicated region
    $region30: #{head2_forward.1} parent=1 // pred_check
      _
    $region31: #{head2_forward.1} parent=1 // pred_check_branch
      %244 = sbr.rel (0) target = $region33
    $region32: #{head2_forward.1} parent=1 // pred_region
      _
    $region33: #{head2_forward.1} parent=1 // pred_fallthru
      _
    // Predicated region
    $region34: #{head2_forward.1} parent=1 // pred_check
      _
    $region35: #{head2_forward.1} parent=1 // pred_check_branch
      %246 = sbr.rel (0) target = $region37
    $region36: #{head2_forward.1} parent=1 // pred_region
      _
    $region37: #{head2_forward.1} parent=1 // pred_fallthru
      _
    %247 = vsyncpa [#allocation3], 1
    %248 = vsyncpa [#allocation5], 1

</llo_original>
